<compile_context>
chip_gen: v7x
topology: tpu7x:2x2x1
jax: 0.10.0
libtpu: 0.0.40
codegen_flags: <defaults>
</compile_context>

<pallas_src>
import functools

import jax
import jax.numpy as jnp
from jax.experimental import pallas as pl
from jax.experimental.pallas import tpu as pltpu

LANE = 128


def _round_up(v, m):
    return ((v + m - 1) // m) * m


def _pad_dim(d):
    # 128-lane padding; >128 dims padded to 256 multiples (v6e/v7x 256-wide MXU).
    return _round_up(max(d, 1), LANE) if d <= LANE else _round_up(d, 2 * LANE)


def _tpu_vmem_bytes():
    try:
        return int(pltpu.get_tpu_info().vmem_capacity_bytes)
    except Exception:
        return 64 * 1024 * 1024  # conservative (v7x per-TC VMEM)


# ------------------------------------------------------------------------------
# Fast path: fully fused, S resident in VMEM, single pallas_call (no grid).
# ------------------------------------------------------------------------------
def _sgc_fused_kernel(x_ref, s_ref, w_ref, b_ref, p_ref,
                      nodes_ref, pooled_ref, h0_ref, h1_ref, *, n_layers):
    # h0 = x @ W   (W-first reordering; bf16 operands, f32 accumulation)
    h0_ref[...] = jnp.dot(x_ref[...], w_ref[...],
                          preferred_element_type=jnp.float32)
    bufs = (h0_ref, h1_ref)
    for k in range(n_layers):  # static K -> unrolled; S stays resident in VMEM
        src, dst = bufs[k % 2], bufs[(k + 1) % 2]
        dst[...] = jnp.dot(s_ref[...], src[...].astype(jnp.bfloat16),
                           preferred_element_type=jnp.float32)
    act = jnp.maximum(bufs[n_layers % 2][...] + b_ref[...], 0.0)
    nodes_ref[...] = act.astype(nodes_ref.dtype)          # bf16 node features
    pooled_ref[...] = jnp.dot(p_ref[...], act,            # f32 pool path
                              preferred_element_type=jnp.float32)


def _sgc_fused(x_bf, s_bf, w_bf, b_f32, p_f32, *, n_layers, vmem_limit):
    np_, fp = x_bf.shape
    hp = w_bf.shape[1]
    gp = p_f32.shape[0]
    flops = 2 * np_ * fp * hp + n_layers * 2 * np_ * np_ * hp + 2 * gp * np_ * hp
    bytes_accessed = (np_ * fp * 2 + np_ * np_ * 2 + fp * hp * 2 + hp * 4
                      + gp * np_ * 4 + np_ * hp * 2 + gp * hp * 4)
    vmem_spec = pl.BlockSpec(memory_space=pltpu.MemorySpace.VMEM)
    nodes, pooled = pl.pallas_call(
        functools.partial(_sgc_fused_kernel, n_layers=n_layers),
        out_shape=(jax.ShapeDtypeStruct((np_, hp), jnp.bfloat16),
                   jax.ShapeDtypeStruct((gp, hp), jnp.float32)),
        in_specs=[vmem_spec] * 5,
        out_specs=(vmem_spec, vmem_spec),
        scratch_shapes=[pltpu.VMEM((np_, hp), jnp.float32),
                        pltpu.VMEM((np_, hp), jnp.float32)],
        compiler_params=pltpu.CompilerParams(vmem_limit_bytes=vmem_limit),
        cost_estimate=pl.CostEstimate(flops=flops, transcendentals=0,
                                      bytes_accessed=bytes_accessed),
    )(x_bf, s_bf, w_bf, b_f32, p_f32)
    return nodes, pooled


# ------------------------------------------------------------------------------
# Fallback path (S does not fit VMEM): tiled kernels with resident h.
# ------------------------------------------------------------------------------
def _xw_kernel(x_ref, w_ref, h_ref):
    h_ref[...] = jnp.dot(x_ref[...], w_ref[...],
                         preferred_element_type=jnp.float32).astype(h_ref.dtype)


def _xw(x_bf, w_bf, *, tm, vmem_limit):
    np_, fp = x_bf.shape
    hp = w_bf.shape[1]
    return pl.pallas_call(
        _xw_kernel,
        out_shape=jax.ShapeDtypeStruct((np_, hp), jnp.bfloat16),
        grid=(np_ // tm,),
        in_specs=[pl.BlockSpec((tm, fp), lambda i: (i, 0)),
                  pl.BlockSpec((fp, hp), lambda i: (0, 0))],
        out_specs=pl.BlockSpec((tm, hp), lambda i: (i, 0)),
        compiler_params=pltpu.CompilerParams(
            dimension_semantics=("parallel",), vmem_limit_bytes=vmem_limit),
        cost_estimate=pl.CostEstimate(
            flops=2 * np_ * fp * hp, transcendentals=0,
            bytes_accessed=np_ * fp * 2 + fp * hp * 2 + np_ * hp * 2),
    )(x_bf, w_bf)


def _prop_kernel(s_ref, h_ref, o_ref, acc_ref, *, tk):
    k = pl.program_id(1)

    @pl.when(k == 0)
    def _():
        acc_ref[...] = jnp.zeros_like(acc_ref)

    start = pl.multiple_of(k * tk, tk)
    acc_ref[...] += jnp.dot(s_ref[...], h_ref[pl.ds(start, tk), :],
                            preferred_element_type=jnp.float32)

    @pl.when(k == pl.num_programs(1) - 1)
    def _():
        o_ref[...] = acc_ref[...].astype(o_ref.dtype)


def _prop_step(s_bf, h_bf, *, tm, tk, vmem_limit):
    np_ = s_bf.shape[0]
    hp = h_bf.shape[1]
    return pl.pallas_call(
        functools.partial(_prop_kernel, tk=tk),
        out_shape=jax.ShapeDtypeStruct((np_, hp), jnp.bfloat16),
        grid=(np_ // tm, np_ // tk),
        in_specs=[
            pl.BlockSpec((tm, tk), lambda i, k: (i, k),
                         pipeline_mode=pl.Buffered(3)),   # deeper S pipelining
            pl.BlockSpec((np_, hp), lambda i, k: (0, 0)),  # h fully resident
        ],
        out_specs=pl.BlockSpec((tm, hp), lambda i, k: (i, 0)),
        scratch_shapes=[pltpu.VMEM((tm, hp), jnp.float32)],
        compiler_params=pltpu.CompilerParams(
            dimension_semantics=("parallel", "arbitrary"),
            vmem_limit_bytes=vmem_limit),
        cost_estimate=pl.CostEstimate(
            flops=2 * np_ * np_ * hp, transcendentals=0,
            bytes_accessed=np_ * np_ * 2 + np_ * hp * 2 + np_ * hp * 2),
    )(s_bf, h_bf)


def _prop_last_kernel(s_ref, h_ref, b_ref, p_ref, nodes_ref, pooled_ref,
                      acc_ref, *, tk):
    k = pl.program_id(1)

    @pl.when(k == 0)
    def _():
        acc_ref[...] = jnp.zeros_like(acc_ref)

    start = pl.multiple_of(k * tk, tk)
    acc_ref[...] += jnp.dot(s_ref[...], h_ref[pl.ds(start, tk), :],
                            preferred_element_type=jnp.float32)

    @pl.when(k == pl.num_programs(1) - 1)
    def _():
        # Fused epilogue: bias + ReLU + nodes + per-row-tile pooled partial.
        act = jnp.maximum(acc_ref[...] + b_ref[...], 0.0)
        nodes_ref[...] = act.astype(nodes_ref.dtype)
        pooled_ref[...] = jnp.dot(p_ref[...], act,
                                  preferred_element_type=jnp.float32)


def _prop_last_step(s_bf, h_bf, b_f32, p_f32, *, tm, tk, vmem_limit):
    np_ = s_bf.shape[0]
    hp = h_bf.shape[1]
    gp = p_f32.shape[0]
    n_row = np_ // tm
    return pl.pallas_call(
        functools.partial(_prop_last_kernel, tk=tk),
        out_shape=(jax.ShapeDtypeStruct((np_, hp), jnp.bfloat16),
                   jax.ShapeDtypeStruct((n_row, gp, hp), jnp.float32)),
        grid=(n_row, np_ // tk),
        in_specs=[
            pl.BlockSpec((tm, tk), lambda i, k: (i, k),
                         pipeline_mode=pl.Buffered(3)),
            pl.BlockSpec((np_, hp), lambda i, k: (0, 0)),   # resident h
            pl.BlockSpec((1, hp), lambda i, k: (0, 0)),
            pl.BlockSpec((gp, tm), lambda i, k: (0, i)),
        ],
        out_specs=(pl.BlockSpec((tm, hp), lambda i, k: (i, 0)),
                   pl.BlockSpec((None, gp, hp), lambda i, k: (i, 0, 0))),
        scratch_shapes=[pltpu.VMEM((tm, hp), jnp.float32)],
        compiler_params=pltpu.CompilerParams(
            dimension_semantics=("parallel", "arbitrary"),
            vmem_limit_bytes=vmem_limit),
        cost_estimate=pl.CostEstimate(
            flops=2 * np_ * np_ * hp + 2 * gp * np_ * hp, transcendentals=0,
            bytes_accessed=(np_ * np_ * 2 + np_ * hp * 2 + hp * 4
                            + gp * np_ * 4 + np_ * hp * 2 + n_row * gp * hp * 4)),
    )(s_bf, h_bf, b_f32, p_f32)


def _pick_tiles(np_, hp, gp, budget):
    tm_cands = [t for t in (2048, 1024, 512, 256, 128) if t <= np_ and np_ % t == 0]
    tk_cands = [t for t in (1024, 512, 256, 128) if t <= np_ and np_ % t == 0]
    for tm in tm_cands:
        for tk in tk_cands:
            need = (2 * np_ * hp * 2        # resident h (double-buffered bf16)
                    + 3 * tm * tk * 2       # Buffered(3) S tiles
                    + tm * hp * 4           # f32 accumulator scratch
                    + 2 * tm * hp * 2       # nodes out double buffer
                    + 2 * gp * tm * 4       # P tile double buffer (last step)
                    + 2 * gp * hp * 4)      # pooled partial out buffers
            if need <= budget:
                return tm, tk
    return 128, 128


# -------------------------------- wrapper -------------------------------------
def _gcn_norm_dense(edge_index, n_nodes):
    """Dense S such that (S @ x)[j] == PyG SGConv propagation (gcn_norm,
    unit edge weights: existing self loops collapse to one weight-1 loop)."""
    src, dst = edge_index[0], edge_index[1]
    not_loop = (src != dst).astype(jnp.float32)
    a = jnp.zeros((n_nodes, n_nodes), jnp.float32).at[dst, src].add(not_loop)
    a = a + jnp.eye(n_nodes, dtype=jnp.float32)
    deg = a.sum(axis=1)
    dinv = jnp.where(deg > 0, jax.lax.rsqrt(deg), 0.0)
    return dinv[:, None] * a * dinv[None, :]


def _padded_s_bf16(edge_index, n_nodes, np_):
    # Cast to bf16 right after normalization and write straight into the padded
    # buffer (no padded f32 intermediate).
    s_bf = _gcn_norm_dense(edge_index, n_nodes).astype(jnp.bfloat16)
    return jnp.zeros((np_, np_), jnp.bfloat16).at[:n_nodes, :n_nodes].set(s_bf)


def sgc_forward(x, edge_index, batch, weight, bias, *, n_layers, num_graphs,
                force_tiled=False):
    assert n_layers >= 1
    n_nodes, feat_dim = x.shape
    hidden_dim = weight.shape[1]

    np_ = _round_up(max(n_nodes, 8), LANE)
    fp = _pad_dim(feat_dim)
    hp = _pad_dim(hidden_dim)
    gp = _round_up(max(num_graphs, 1), 8)

    vmem_cap = _tpu_vmem_bytes()
    budget = max(vmem_cap - (16 << 20), 32 << 20)  # per-generation VMEM budget
    vmem_limit = budget

    # Wrapper-side glue (dense S + padded operands).
    # TODO(synk): for very large graphs replace dense S with a sparse SpMM kernel
    # driven by PrefetchScalarGridSpec (CSR row offsets as scalar prefetch).
    s_bf = _padded_s_bf16(edge_index, n_nodes, np_)
    x_bf = jnp.zeros((np_, fp), jnp.bfloat16).at[:n_nodes, :feat_dim].set(
        x.astype(jnp.bfloat16))
    w_bf = jnp.zeros((fp, hp), jnp.bfloat16).at[:feat_dim, :hidden_dim].set(
        weight.astype(jnp.bfloat16))
    b_f32 = jnp.zeros((1, hp), jnp.float32).at[0, :hidden_dim].set(bias)
    batch_p = jnp.full((np_,), -1, jnp.int32).at[:n_nodes].set(batch.astype(jnp.int32))
    p_f32 = (batch_p[None, :] == jnp.arange(gp, dtype=jnp.int32)[:, None]
             ).astype(jnp.float32)

    # Footprint of the fully fused, S-resident kernel.
    resident_bytes = (np_ * np_ * 2 + np_ * fp * 2 + fp * hp * 2 + hp * 4
                      + gp * np_ * 4 + np_ * hp * 2 + gp * hp * 4
                      + 2 * np_ * hp * 4)

    if (not force_tiled) and resident_bytes <= budget:
        nodes_p, pooled_p = _sgc_fused(x_bf, s_bf, w_bf, b_f32, p_f32,
                                       n_layers=n_layers, vmem_limit=vmem_limit)
    else:
        tm, tk = _pick_tiles(np_, hp, gp, budget)
        h_bf = _xw(x_bf, w_bf, tm=tm, vmem_limit=vmem_limit)
        for _ in range(n_layers - 1):
            h_bf = _prop_step(s_bf, h_bf, tm=tm, tk=tk, vmem_limit=vmem_limit)
        nodes_p, pooled_parts = _prop_last_step(
            s_bf, h_bf, b_f32, p_f32, tm=tm, tk=tk, vmem_limit=vmem_limit)
        pooled_p = pooled_parts.sum(axis=0)

    pooled = pooled_p[:num_graphs, :hidden_dim]
    nodes = nodes_p[:n_nodes, :hidden_dim].astype(jnp.float32)
    return pooled, nodes


# ------------------------------ reference -------------------------------------
def sgc_reference(x, edge_index, batch, weight, bias, *, n_layers, num_graphs):
    n_nodes = x.shape[0]
    s = _gcn_norm_dense(edge_index, n_nodes)
    h = x
    for _ in range(n_layers):
        h = s @ h
    h = jnp.maximum(h @ weight + bias[None, :], 0.0)
    p = (batch[None, :] == jnp.arange(num_graphs)[:, None]).astype(jnp.float32)
    return p @ h, h


# -------------------------------- main -----------------------------------------
if __name__ == "__main__":
    key = jax.random.PRNGKey(0)

    # Small synthetic graph batch: 2 graphs, 16 nodes total.
    n_nodes = 16
    feat_dim = 8
    hidden_dim = 32
    n_layers = 3
    num_graphs = 2

    k_x, k_e, k_w = jax.random.split(key, 3)
    x = jax.random.normal(k_x, (n_nodes, feat_dim), dtype=jnp.float32)

    # Random intra-graph edges (graph0 = nodes 0..7, graph1 = nodes 8..15),
    # stored in both directions (standard PyG undirected-graph convention).
    e0 = jax.random.randint(k_e, (2, 12), 0, 8)
    e1 = jax.random.randint(jax.random.fold_in(k_e, 1), (2, 12), 8, 16)
    e_dir = jnp.concatenate([e0, e1], axis=1).astype(jnp.int32)
    edge_index = jnp.concatenate([e_dir, e_dir[::-1]], axis=1)  # [2, E]

    batch = jnp.concatenate(
        [jnp.zeros(8, jnp.int32), jnp.ones(8, jnp.int32)]
    )  # [N] graph id per node

    # Deterministic xavier-uniform init for the SGConv linear layer (bias = 0).
    bound = (6.0 / (feat_dim + hidden_dim)) ** 0.5
    weight = jax.random.uniform(
        k_w, (feat_dim, hidden_dim), minval=-bound, maxval=bound, dtype=jnp.float32
    )
    bias = jnp.zeros((hidden_dim,), jnp.float32)

    ref_pooled, ref_nodes = sgc_reference(
        x, edge_index, batch, weight, bias,
        n_layers=n_layers, num_graphs=num_graphs,
    )

    # Fast path (fully fused, S resident in VMEM).
    pooled, nodes = sgc_forward(
        x, edge_index, batch, weight, bias,
        n_layers=n_layers, num_graphs=num_graphs, force_tiled=False,
    )
    jax.block_until_ready((pooled, nodes))
    assert pooled.shape == (num_graphs, hidden_dim)
    assert nodes.shape == (n_nodes, hidden_dim)
    assert jnp.allclose(pooled, ref_pooled, atol=5e-2, rtol=5e-2)
    assert jnp.allclose(nodes, ref_nodes, atol=5e-2, rtol=5e-2)

    # Tiled fallback path (forced) — validates the large-graph code path too.
    pooled_t, nodes_t = sgc_forward(
        x, edge_index, batch, weight, bias,
        n_layers=n_layers, num_graphs=num_graphs, force_tiled=True,
    )
    jax.block_until_ready((pooled_t, nodes_t))
    assert jnp.allclose(pooled_t, ref_pooled, atol=5e-2, rtol=5e-2)
    assert jnp.allclose(nodes_t, ref_nodes, atol=5e-2, rtol=5e-2)

    print("KERNEL_OK")
</pallas_src>

<mosaic_0001>
module attributes {stable_mosaic.version = 11 : i64} {
  func.func @_sgc_fused_kernel(%arg0: memref<128x128xbf16, #tpu.memory_space<vmem>>, %arg1: memref<128x128xbf16, #tpu.memory_space<vmem>>, %arg2: memref<128x128xbf16, #tpu.memory_space<vmem>>, %arg3: memref<1x128xf32, #tpu.memory_space<vmem>>, %arg4: memref<8x128xf32, #tpu.memory_space<vmem>>, %arg5: memref<128x128xbf16, #tpu.memory_space<vmem>>, %arg6: memref<8x128xf32, #tpu.memory_space<vmem>>, %arg7: memref<128x128xf32, #tpu.memory_space<vmem>>, %arg8: memref<128x128xf32, #tpu.memory_space<vmem>>) attributes {dimension_semantics = [], scalar_prefetch = 0 : i64, scratch_operands = 2 : i64, tpu.core_type = #tpu.core_type<tc>} {
    %c0 = arith.constant 0 : index
    %c0_0 = arith.constant 0 : index
    %0 = vector.load %arg0[%c0, %c0_0] : memref<128x128xbf16, #tpu.memory_space<vmem>>, vector<128x128xbf16>
    %c0_1 = arith.constant 0 : index
    %c0_2 = arith.constant 0 : index
    %1 = vector.load %arg2[%c0_1, %c0_2] : memref<128x128xbf16, #tpu.memory_space<vmem>>, vector<128x128xbf16>
    %cst = arith.constant dense<0.000000e+00> : vector<128x128xf32>
    %2 = tpu.matmul %0, %1, %cst {dimension_numbers = #tpu.dot_dimension_numbers<[1], [0], [0], [1], [0, 0, 1, 1], [], []>} : vector<128x128xbf16>, vector<128x128xbf16>, vector<128x128xf32> -> vector<128x128xf32>
    %c0_3 = arith.constant 0 : index
    %c0_4 = arith.constant 0 : index
    %3 = vector.load %arg7[%c0_3, %c0_4] : memref<128x128xf32, #tpu.memory_space<vmem>>, vector<128x128xf32>
    tpu.vector_store %arg7[%c0_3, %c0_4], %2 {strides = array<i32>} : memref<128x128xf32, #tpu.memory_space<vmem>>, vector<128x128xf32>,
    %c0_5 = arith.constant 0 : index
    %c0_6 = arith.constant 0 : index
    %4 = vector.load %arg1[%c0_5, %c0_6] : memref<128x128xbf16, #tpu.memory_space<vmem>>, vector<128x128xbf16>
    %c0_7 = arith.constant 0 : index
    %c0_8 = arith.constant 0 : index
    %5 = vector.load %arg7[%c0_7, %c0_8] : memref<128x128xf32, #tpu.memory_space<vmem>>, vector<128x128xf32>
    %6 = arith.truncf %5 : vector<128x128xf32> to vector<128x128xbf16>
    %cst_9 = arith.constant dense<0.000000e+00> : vector<128x128xf32>
    %7 = tpu.matmul %4, %6, %cst_9 {dimension_numbers = #tpu.dot_dimension_numbers<[1], [0], [0], [1], [0, 0, 1, 1], [], []>} : vector<128x128xbf16>, vector<128x128xbf16>, vector<128x128xf32> -> vector<128x128xf32>
    %c0_10 = arith.constant 0 : index
    %c0_11 = arith.constant 0 : index
    %8 = vector.load %arg8[%c0_10, %c0_11] : memref<128x128xf32, #tpu.memory_space<vmem>>, vector<128x128xf32>
    tpu.vector_store %arg8[%c0_10, %c0_11], %7 {strides = array<i32>} : memref<128x128xf32, #tpu.memory_space<vmem>>, vector<128x128xf32>,
    %c0_12 = arith.constant 0 : index
    %c0_13 = arith.constant 0 : index
    %9 = vector.load %arg1[%c0_12, %c0_13] : memref<128x128xbf16, #tpu.memory_space<vmem>>, vector<128x128xbf16>
    %c0_14 = arith.constant 0 : index
    %c0_15 = arith.constant 0 : index
    %10 = vector.load %arg8[%c0_14, %c0_15] : memref<128x128xf32, #tpu.memory_space<vmem>>, vector<128x128xf32>
    %11 = arith.truncf %10 : vector<128x128xf32> to vector<128x128xbf16>
    %cst_16 = arith.constant dense<0.000000e+00> : vector<128x128xf32>
    %12 = tpu.matmul %9, %11, %cst_16 {dimension_numbers = #tpu.dot_dimension_numbers<[1], [0], [0], [1], [0, 0, 1, 1], [], []>} : vector<128x128xbf16>, vector<128x128xbf16>, vector<128x128xf32> -> vector<128x128xf32>
    %c0_17 = arith.constant 0 : index
    %c0_18 = arith.constant 0 : index
    %13 = vector.load %arg7[%c0_17, %c0_18] : memref<128x128xf32, #tpu.memory_space<vmem>>, vector<128x128xf32>
    tpu.vector_store %arg7[%c0_17, %c0_18], %12 {strides = array<i32>} : memref<128x128xf32, #tpu.memory_space<vmem>>, vector<128x128xf32>,
    %c0_19 = arith.constant 0 : index
    %c0_20 = arith.constant 0 : index
    %14 = vector.load %arg1[%c0_19, %c0_20] : memref<128x128xbf16, #tpu.memory_space<vmem>>, vector<128x128xbf16>
    %c0_21 = arith.constant 0 : index
    %c0_22 = arith.constant 0 : index
    %15 = vector.load %arg7[%c0_21, %c0_22] : memref<128x128xf32, #tpu.memory_space<vmem>>, vector<128x128xf32>
    %16 = arith.truncf %15 : vector<128x128xf32> to vector<128x128xbf16>
    %cst_23 = arith.constant dense<0.000000e+00> : vector<128x128xf32>
    %17 = tpu.matmul %14, %16, %cst_23 {dimension_numbers = #tpu.dot_dimension_numbers<[1], [0], [0], [1], [0, 0, 1, 1], [], []>} : vector<128x128xbf16>, vector<128x128xbf16>, vector<128x128xf32> -> vector<128x128xf32>
    %c0_24 = arith.constant 0 : index
    %c0_25 = arith.constant 0 : index
    %18 = vector.load %arg8[%c0_24, %c0_25] : memref<128x128xf32, #tpu.memory_space<vmem>>, vector<128x128xf32>
    tpu.vector_store %arg8[%c0_24, %c0_25], %17 {strides = array<i32>} : memref<128x128xf32, #tpu.memory_space<vmem>>, vector<128x128xf32>,
    %c0_26 = arith.constant 0 : index
    %c0_27 = arith.constant 0 : index
    %19 = vector.load %arg8[%c0_26, %c0_27] : memref<128x128xf32, #tpu.memory_space<vmem>>, vector<128x128xf32>
    %c0_28 = arith.constant 0 : index
    %c0_29 = arith.constant 0 : index
    %20 = vector.load %arg3[%c0_28, %c0_29] : memref<1x128xf32, #tpu.memory_space<vmem>>, vector<1x128xf32>
    %21 = vector.broadcast %20 : vector<1x128xf32> to vector<128x128xf32>
    %22 = arith.addf %19, %21 : vector<128x128xf32>
    %cst_30 = arith.constant 0.000000e+00 : f32
    %23 = vector.broadcast %cst_30 : f32 to vector<128x128xf32>
    %24 = arith.maximumf %22, %23 : vector<128x128xf32>
    %25 = arith.truncf %24 : vector<128x128xf32> to vector<128x128xbf16>
    %c0_31 = arith.constant 0 : index
    %c0_32 = arith.constant 0 : index
    %26 = vector.load %arg5[%c0_31, %c0_32] : memref<128x128xbf16, #tpu.memory_space<vmem>>, vector<128x128xbf16>
    tpu.vector_store %arg5[%c0_31, %c0_32], %25 {strides = array<i32>} : memref<128x128xbf16, #tpu.memory_space<vmem>>, vector<128x128xbf16>,
    %c0_33 = arith.constant 0 : index
    %c0_34 = arith.constant 0 : index
    %27 = vector.load %arg4[%c0_33, %c0_34] : memref<8x128xf32, #tpu.memory_space<vmem>>, vector<8x128xf32>
    %cst_35 = arith.constant dense<0.000000e+00> : vector<8x128xf32>
    %28 = tpu.matmul %27, %24, %cst_35 {dimension_numbers = #tpu.dot_dimension_numbers<[1], [0], [0], [1], [0, 0, 1, 1], [], []>} : vector<8x128xf32>, vector<128x128xf32>, vector<8x128xf32> -> vector<8x128xf32>
    %c0_36 = arith.constant 0 : index
    %c0_37 = arith.constant 0 : index
    %29 = vector.load %arg6[%c0_36, %c0_37] : memref<8x128xf32, #tpu.memory_space<vmem>>, vector<8x128xf32>
    tpu.vector_store %arg6[%c0_36, %c0_37], %28 {strides = array<i32>} : memref<8x128xf32, #tpu.memory_space<vmem>>, vector<8x128xf32>,
    return
  }
}

</mosaic_0001>

<llo_original>
// kernel: tpu_custom_call.1
$region0: #{tpu_custom_call.1}
  #allocation0 [shape = 'u32[]', space=smem, size = 0x4, offset = 0x4, fixed_abs, tag = 'smem constant byte address 0x4 - core index']
  #allocation1 [shape = 'u32[144,128]{1,0:T(1,128)}', space=vmem, size = 0x12000, scoped, tag = 'internal scratch']
  #allocation2 [shape = 'f32[128,128]{1,0:T(8,128)}', space=vmem, size = 0x10000, scoped, tag = 'scratch operand']
  #allocation3 [shape = 'f32[128,128]{1,0:T(8,128)}', space=vmem, size = 0x10000, scoped, tag = 'scratch operand']
  %s0 = inlined_call_operand.hbm [shape: bf16[128,128], index: 0, kind: input, shape index: {}]
  %s1 = inlined_call_operand.hbm [shape: bf16[128,128], index: 1, kind: input, shape index: {}]
  %s2 = inlined_call_operand.hbm [shape: bf16[128,128], index: 2, kind: input, shape index: {}]
  %s3 = inlined_call_operand.vmem [shape: f32[1,128], index: 3, kind: input, shape index: {}]
  %s4 = inlined_call_operand.vmem [shape: f32[8,128], index: 4, kind: input, shape index: {}]
  %s5 = inlined_call_operand.hbm [shape: bf16[128,128], index: 5, kind: output, shape index: {0}]
  %s6 = inlined_call_operand.hbm [shape: f32[8,128], index: 6, kind: output, shape index: {1}]
  %7 = xla_tuple %s5, %s6
  %s8 = sld [smem:[#allocation0]]
  $region50: #{tpu_custom_call.1} parent=0
    _
  %s10 = ssub.s32 1, %s8
  %s11 = scalar_select 0, %s10, %s8
  $region1: #{tpu_custom_call.1} parent=0
    #allocation4 [shape = 'u8[32768]{0}', space=vmem, size = 0x8000, scoped, tag = 'input window, operand 0, single buffered']
    #allocation5 [shape = 's32[1]{0}', space=sflag, size = 0x4, scoped, tag = 'scoped memory for tpu_custom_call.1']
    #allocation6 [shape = 's32[1]{0}', space=sflag, size = 0x4, scoped, tag = 'scoped memory for tpu_custom_call.1']
    #allocation7 [shape = 'u8[32768]{0}', space=vmem, size = 0x8000, scoped, tag = 'input window, operand 1, single buffered']
    #allocation8 [shape = 's32[1]{0}', space=sflag, size = 0x4, scoped, tag = 'scoped memory for tpu_custom_call.1']
    #allocation9 [shape = 'u8[32768]{0}', space=vmem, size = 0x8000, scoped, tag = 'input window, operand 2, single buffered']
    #allocation10 [shape = 'u8[32768]{0}', space=vmem, size = 0x8000, scoped, tag = 'output window, operand 0, single buffered']
    #allocation11 [shape = 'u8[4096]{0}', space=vmem, size = 0x1000, scoped, tag = 'output window, operand 1, single buffered']
    #allocation12 [shape = 's32[1]{0}', space=sflag, size = 0x4, scoped, tag = 'scoped memory for tpu_custom_call.1']
    %12 = vsyncpa [#allocation5], 0
    %13 = vsyncpa [#allocation8], 0
    %14 = vsyncpa [#allocation6], 0
    %15 = vsyncpa [#allocation12], 0
    // Predicated region
    $region2: #{tpu_custom_call.1} parent=1 // pred_check
      _
    $region3: #{tpu_custom_call.1} parent=1 // pred_check_branch
      %17 = sbr.rel (0) target = $region5
    $region4: #{tpu_custom_call.1} parent=1 // pred_region
      %s19 = ssub.s32 1024, 1024
      %20 = vsyncadd [#allocation5], %s19
      %s21 = sshll.u32 [#allocation4], 4
      %s22 = int_to_ptr.vmem [resolvable:$true] %s21
      %27 = dma.hbm_to_vmem [thread:$0]  %s0, 1024, %s22, [#allocation5], 64, 64, 4
    $region5: #{tpu_custom_call.1} parent=1 // pred_fallthru
      _
    // Predicated region
    $region6: #{tpu_custom_call.1} parent=1 // pred_check
      _
    $region7: #{tpu_custom_call.1} parent=1 // pred_check_branch
      %29 = sbr.rel (0) target = $region9
    $region8: #{tpu_custom_call.1} parent=1 // pred_region
      %s31 = ssub.s32 1024, 1024
      %32 = vsyncadd [#allocation8], %s31
      %s33 = sshll.u32 [#allocation7], 4
      %s34 = int_to_ptr.vmem [resolvable:$true] %s33
      %39 = dma.hbm_to_vmem [thread:$0]  %s1, 1024, %s34, [#allocation8], 64, 64, 4
    $region9: #{tpu_custom_call.1} parent=1 // pred_fallthru
      _
    // Predicated region
    $region10: #{tpu_custom_call.1} parent=1 // pred_check
      _
    $region11: #{tpu_custom_call.1} parent=1 // pred_check_branch
      %41 = sbr.rel (0) target = $region13
    $region12: #{tpu_custom_call.1} parent=1 // pred_region
      %s43 = ssub.s32 1024, 1024
      %44 = vsyncadd [#allocation8], %s43
      %s45 = sshll.u32 [#allocation9], 4
      %s46 = int_to_ptr.vmem [resolvable:$true] %s45
      %51 = dma.hbm_to_vmem [thread:$0]  %s2, 1024, %s46, [#allocation8], 64, 64, 4
    $region13: #{tpu_custom_call.1} parent=1 // pred_fallthru
      _
    // Predicated region
    $region14: #{tpu_custom_call.1} parent=1 // pred_check
      _
    $region15: #{tpu_custom_call.1} parent=1 // pred_check_branch
      %53 = sbr.rel (0) target = $region17
    $region16: #{tpu_custom_call.1} parent=1 // pred_region
      _
    $region17: #{tpu_custom_call.1} parent=1 // pred_fallthru
      _
    // Predicated region
    $region18: #{tpu_custom_call.1} parent=1 // pred_check
      _
    $region19: #{tpu_custom_call.1} parent=1 // pred_check_branch
      %55 = sbr.rel (0) target = $region21
    $region20: #{tpu_custom_call.1} parent=1 // pred_region
      _
    $region21: #{tpu_custom_call.1} parent=1 // pred_fallthru
      _
    // Predicated region
    $region22: #{tpu_custom_call.1} parent=1 // pred_check
      _
    $region23: #{tpu_custom_call.1} parent=1 // pred_check_branch
      %57 = sbr.rel (0) target = $region25
    $region24: #{tpu_custom_call.1} parent=1 // pred_region
      %58 = dma.done [#allocation5], 1024
    $region25: #{tpu_custom_call.1} parent=1 // pred_fallthru
      _
    // Predicated region
    $region26: #{tpu_custom_call.1} parent=1 // pred_check
      _
    $region27: #{tpu_custom_call.1} parent=1 // pred_check_branch
      %60 = sbr.rel (0) target = $region29
    $region28: #{tpu_custom_call.1} parent=1 // pred_region
      %61 = dma.done [#allocation8], 1024
    $region29: #{tpu_custom_call.1} parent=1 // pred_fallthru
      _
    // Predicated region
    $region30: #{tpu_custom_call.1} parent=1 // pred_check
      _
    $region31: #{tpu_custom_call.1} parent=1 // pred_check_branch
      %63 = sbr.rel (0) target = $region33
    $region32: #{tpu_custom_call.1} parent=1 // pred_region
      %64 = dma.done [#allocation8], 1024
    $region33: #{tpu_custom_call.1} parent=1 // pred_fallthru
      _
    %v66 = vld [vmem:[#allocation4] sm:$0xf]
    %v67 = vld [vmem:[#allocation4 + $0x4] sm:$0xf]
    %v68 = vld [vmem:[#allocation4 + $0x8] sm:$0xf]
    %v69 = vld [vmem:[#allocation4 + $0xc] sm:$0xf]
    %v70 = vld [vmem:[#allocation4 + $0x10] sm:$0xf]
    %v71 = vld [vmem:[#allocation4 + $0x14] sm:$0xf]
    %v72 = vld [vmem:[#allocation4 + $0x18] sm:$0xf]
    %v73 = vld [vmem:[#allocation4 + $0x1c] sm:$0xf]
    %v74 = vld [vmem:[#allocation4 + $0x20] sm:$0xf]
    %v75 = vld [vmem:[#allocation4 + $0x24] sm:$0xf]
    %v76 = vld [vmem:[#allocation4 + $0x28] sm:$0xf]
    %v77 = vld [vmem:[#allocation4 + $0x2c] sm:$0xf]
    %v78 = vld [vmem:[#allocation4 + $0x30] sm:$0xf]
    %v79 = vld [vmem:[#allocation4 + $0x34] sm:$0xf]
    %v80 = vld [vmem:[#allocation4 + $0x38] sm:$0xf]
    %v81 = vld [vmem:[#allocation4 + $0x3c] sm:$0xf]
    %v82 = vld [vmem:[#allocation9] sm:$0xf]
    %v83 = vld [vmem:[#allocation9 + $0x4] sm:$0xf]
    %v84 = vld [vmem:[#allocation9 + $0x8] sm:$0xf]
    %v85 = vld [vmem:[#allocation9 + $0xc] sm:$0xf]
    %v86 = vld [vmem:[#allocation9 + $0x10] sm:$0xf]
    %v87 = vld [vmem:[#allocation9 + $0x14] sm:$0xf]
    %v88 = vld [vmem:[#allocation9 + $0x18] sm:$0xf]
    %v89 = vld [vmem:[#allocation9 + $0x1c] sm:$0xf]
    %v90 = vld [vmem:[#allocation9 + $0x20] sm:$0xf]
    %v91 = vld [vmem:[#allocation9 + $0x24] sm:$0xf]
    %v92 = vld [vmem:[#allocation9 + $0x28] sm:$0xf]
    %v93 = vld [vmem:[#allocation9 + $0x2c] sm:$0xf]
    %v94 = vld [vmem:[#allocation9 + $0x30] sm:$0xf]
    %v95 = vld [vmem:[#allocation9 + $0x34] sm:$0xf]
    %v96 = vld [vmem:[#allocation9 + $0x38] sm:$0xf]
    %v97 = vld [vmem:[#allocation9 + $0x3c] sm:$0xf]
    %v114 = vunpack.c.l.b16 %v66
    %v115 = vunpack.c.l.b16 %v67
    %v116 = vunpack.c.l.b16 %v68
    %v117 = vunpack.c.l.b16 %v69
    %v118 = vunpack.c.l.b16 %v70
    %v119 = vunpack.c.l.b16 %v71
    %v120 = vunpack.c.l.b16 %v72
    %v121 = vunpack.c.l.b16 %v73
    %v122 = vunpack.c.l.b16 %v74
    %v123 = vunpack.c.l.b16 %v75
    %v124 = vunpack.c.l.b16 %v76
    %v125 = vunpack.c.l.b16 %v77
    %v126 = vunpack.c.l.b16 %v78
    %v127 = vunpack.c.l.b16 %v79
    %v128 = vunpack.c.l.b16 %v80
    %v129 = vunpack.c.l.b16 %v81
    %v130 = vpack.c.b16 %v115, %v114
    %v131 = vpack.c.b16 %v117, %v116
    %v132 = vpack.c.b16 %v119, %v118
    %v133 = vpack.c.b16 %v121, %v120
    %v134 = vpack.c.b16 %v123, %v122
    %v135 = vpack.c.b16 %v125, %v124
    %v136 = vpack.c.b16 %v127, %v126
    %v137 = vpack.c.b16 %v129, %v128
    %v162 = vunpack.c.l.b16 %v82
    %v163 = vunpack.c.l.b16 %v83
    %v164 = vunpack.c.l.b16 %v84
    %v165 = vunpack.c.l.b16 %v85
    %v166 = vunpack.c.l.b16 %v86
    %v167 = vunpack.c.l.b16 %v87
    %v168 = vunpack.c.l.b16 %v88
    %v169 = vunpack.c.l.b16 %v89
    %v170 = vunpack.c.l.b16 %v90
    %v171 = vunpack.c.l.b16 %v91
    %v172 = vunpack.c.l.b16 %v92
    %v173 = vunpack.c.l.b16 %v93
    %v174 = vunpack.c.l.b16 %v94
    %v175 = vunpack.c.l.b16 %v95
    %v176 = vunpack.c.l.b16 %v96
    %v177 = vunpack.c.l.b16 %v97
    %v178 = vpack.c.b16 %v163, %v162
    %v179 = vpack.c.b16 %v165, %v164
    %v180 = vpack.c.b16 %v167, %v166
    %v181 = vpack.c.b16 %v169, %v168
    %v182 = vpack.c.b16 %v171, %v170
    %v183 = vpack.c.b16 %v173, %v172
    %v184 = vpack.c.b16 %v175, %v174
    %v185 = vpack.c.b16 %v177, %v176
    %194 = vmatprep.subr.bf16.mxu0 0
    %195 = vmatpush1.bf16.msra.mxu0 %v178
    %196 = vmatprep.subr.bf16.mxu0 0
    %197 = vmatpush1.bf16.msra.mxu0 %v179
    %198 = vmatprep.subr.bf16.mxu0 0
    %199 = vmatpush1.bf16.msra.mxu0 %v180
    %200 = vmatprep.subr.bf16.mxu0 0
    %201 = vmatpush1.bf16.msra.mxu0 %v181
    %202 = vmatprep.subr.bf16.mxu0 0
    %203 = vmatpush1.bf16.msra.mxu0 %v182
    %204 = vmatprep.subr.bf16.mxu0 0
    %205 = vmatpush1.bf16.msra.mxu0 %v183
    %206 = vmatprep.subr.bf16.mxu0 0
    %207 = vmatpush1.bf16.msra.mxu0 %v184
    %208 = vmatprep.subr.bf16.mxu0 0
    %209 = vmatpush1.bf16.msra.mxu0 %v185
    %210 = vmatprep.subr.bf16.mxu0 0
    %211 = vmatpush1.bf16.msra.mxu0 0
    %212 = vmatprep.subr.bf16.mxu0 0
    %213 = vmatpush1.bf16.msra.mxu0 0
    %214 = vmatprep.subr.bf16.mxu0 0
    %215 = vmatpush1.bf16.msra.mxu0 0
    %216 = vmatprep.subr.bf16.mxu0 0
    %217 = vmatpush1.bf16.msra.mxu0 0
    %218 = vmatprep.subr.bf16.mxu0 0
    %219 = vmatpush1.bf16.msra.mxu0 0
    %220 = vmatprep.subr.bf16.mxu0 0
    %221 = vmatpush1.bf16.msra.mxu0 0
    %222 = vmatprep.subr.bf16.mxu0 0
    %223 = vmatpush1.bf16.msra.mxu0 0
    %224 = vmatprep.subr.bf16.mxu0 0
    %225 = vmatpush1.bf16.msra.mxu0 0
    %226 = vmatprep.mubr.bf16.mxu0 0
    %227 = vmatmul.mubr.bf16.gmra.mrb[0].mxu0 %v130
    %v228 = vpop.f32.mrb[0].mxu0
    %v229 = vadd.f32 0.0, %v228
    %v230 = vpop.f32.mrb[0].mxu0
    %v231 = vpop.f32.mrb[0].mxu0
    %v232 = vadd.f32 0.0, %v231
    %v233 = vpop.f32.mrb[0].mxu0
    %234 = vmatprep.mubr.bf16.mxu0 0
    %235 = vmatmul.mubr.bf16.gmra.mrb[0].mxu0 %v131
    %v236 = vpop.f32.mrb[0].mxu0
    %v237 = vadd.f32 0.0, %v236
    %v238 = vpop.f32.mrb[0].mxu0
    %v239 = vpop.f32.mrb[0].mxu0
    %v240 = vadd.f32 0.0, %v239
    %v241 = vpop.f32.mrb[0].mxu0
    %242 = vmatprep.mubr.bf16.mxu0 0
    %243 = vmatmul.mubr.bf16.gmra.mrb[0].mxu0 %v132
    %v244 = vpop.f32.mrb[0].mxu0
    %v245 = vadd.f32 0.0, %v244
    %v246 = vpop.f32.mrb[0].mxu0
    %v247 = vpop.f32.mrb[0].mxu0
    %v248 = vadd.f32 0.0, %v247
    %v249 = vpop.f32.mrb[0].mxu0
    %250 = vmatprep.mubr.bf16.mxu0 0
    %251 = vmatmul.mubr.bf16.gmra.mrb[0].mxu0 %v133
    %v252 = vpop.f32.mrb[0].mxu0
    %v253 = vadd.f32 0.0, %v252
    %v254 = vpop.f32.mrb[0].mxu0
    %v255 = vpop.f32.mrb[0].mxu0
    %v256 = vadd.f32 0.0, %v255
    %v257 = vpop.f32.mrb[0].mxu0
    %258 = vmatprep.mubr.bf16.mxu0 0
    %259 = vmatmul.mubr.bf16.gmra.mrb[0].mxu0 %v134
    %v260 = vpop.f32.mrb[0].mxu0
    %v261 = vadd.f32 0.0, %v260
    %v262 = vpop.f32.mrb[0].mxu0
    %v263 = vpop.f32.mrb[0].mxu0
    %v264 = vadd.f32 0.0, %v263
    %v265 = vpop.f32.mrb[0].mxu0
    %266 = vmatprep.mubr.bf16.mxu0 0
    %267 = vmatmul.mubr.bf16.gmra.mrb[0].mxu0 %v135
    %v268 = vpop.f32.mrb[0].mxu0
    %v269 = vadd.f32 0.0, %v268
    %v270 = vpop.f32.mrb[0].mxu0
    %v271 = vpop.f32.mrb[0].mxu0
    %v272 = vadd.f32 0.0, %v271
    %v273 = vpop.f32.mrb[0].mxu0
    %274 = vmatprep.mubr.bf16.mxu0 0
    %275 = vmatmul.mubr.bf16.gmra.mrb[0].mxu0 %v136
    %v276 = vpop.f32.mrb[0].mxu0
    %v277 = vadd.f32 0.0, %v276
    %v278 = vpop.f32.mrb[0].mxu0
    %v279 = vpop.f32.mrb[0].mxu0
    %v280 = vadd.f32 0.0, %v279
    %v281 = vpop.f32.mrb[0].mxu0
    %282 = vmatprep.mubr.bf16.mxu0 0
    %283 = vmatmul.mubr.bf16.gmra.mrb[0].mxu0 %v137
    %v284 = vpop.f32.mrb[0].mxu0
    %v285 = vadd.f32 0.0, %v284
    %v286 = vpop.f32.mrb[0].mxu0
    %v287 = vpop.f32.mrb[0].mxu0
    %v288 = vadd.f32 0.0, %v287
    %v289 = vpop.f32.mrb[0].mxu0
    %290 = vdwg.mxu0
    %291 = vst [vmem:[#allocation2] sm:$0xff] %v229
    %292 = vst [vmem:[#allocation2 + $0x8] sm:$0xff] %v232
    %293 = vst [vmem:[#allocation2 + $0x10] sm:$0xff] %v237
    %294 = vst [vmem:[#allocation2 + $0x18] sm:$0xff] %v240
    %295 = vst [vmem:[#allocation2 + $0x20] sm:$0xff] %v245
    %296 = vst [vmem:[#allocation2 + $0x28] sm:$0xff] %v248
    %297 = vst [vmem:[#allocation2 + $0x30] sm:$0xff] %v253
    %298 = vst [vmem:[#allocation2 + $0x38] sm:$0xff] %v256
    %299 = vst [vmem:[#allocation2 + $0x40] sm:$0xff] %v261
    %300 = vst [vmem:[#allocation2 + $0x48] sm:$0xff] %v264
    %301 = vst [vmem:[#allocation2 + $0x50] sm:$0xff] %v269
    %302 = vst [vmem:[#allocation2 + $0x58] sm:$0xff] %v272
    %303 = vst [vmem:[#allocation2 + $0x60] sm:$0xff] %v277
    %304 = vst [vmem:[#allocation2 + $0x68] sm:$0xff] %v280
    %305 = vst [vmem:[#allocation2 + $0x70] sm:$0xff] %v285
    %306 = vst [vmem:[#allocation2 + $0x78] sm:$0xff] %v288
    %v307 = vld [vmem:[#allocation7] sm:$0xf]
    %v308 = vld [vmem:[#allocation7 + $0x4] sm:$0xf]
    %v309 = vld [vmem:[#allocation7 + $0x8] sm:$0xf]
    %v310 = vld [vmem:[#allocation7 + $0xc] sm:$0xf]
    %v311 = vld [vmem:[#allocation7 + $0x10] sm:$0xf]
    %v312 = vld [vmem:[#allocation7 + $0x14] sm:$0xf]
    %v313 = vld [vmem:[#allocation7 + $0x18] sm:$0xf]
    %v314 = vld [vmem:[#allocation7 + $0x1c] sm:$0xf]
    %v315 = vld [vmem:[#allocation7 + $0x20] sm:$0xf]
    %v316 = vld [vmem:[#allocation7 + $0x24] sm:$0xf]
    %v317 = vld [vmem:[#allocation7 + $0x28] sm:$0xf]
    %v318 = vld [vmem:[#allocation7 + $0x2c] sm:$0xf]
    %v319 = vld [vmem:[#allocation7 + $0x30] sm:$0xf]
    %v320 = vld [vmem:[#allocation7 + $0x34] sm:$0xf]
    %v321 = vld [vmem:[#allocation7 + $0x38] sm:$0xf]
    %v322 = vld [vmem:[#allocation7 + $0x3c] sm:$0xf]
    %v323 = vld [vmem:[#allocation2] sm:$0xff]
    %v324 = vld [vmem:[#allocation2 + $0x8] sm:$0xff]
    %v325 = vld [vmem:[#allocation2 + $0x10] sm:$0xff]
    %v326 = vld [vmem:[#allocation2 + $0x18] sm:$0xff]
    %v327 = vld [vmem:[#allocation2 + $0x20] sm:$0xff]
    %v328 = vld [vmem:[#allocation2 + $0x28] sm:$0xff]
    %v329 = vld [vmem:[#allocation2 + $0x30] sm:$0xff]
    %v330 = vld [vmem:[#allocation2 + $0x38] sm:$0xff]
    %v331 = vld [vmem:[#allocation2 + $0x40] sm:$0xff]
    %v332 = vld [vmem:[#allocation2 + $0x48] sm:$0xff]
    %v333 = vld [vmem:[#allocation2 + $0x50] sm:$0xff]
    %v334 = vld [vmem:[#allocation2 + $0x58] sm:$0xff]
    %v335 = vld [vmem:[#allocation2 + $0x60] sm:$0xff]
    %v336 = vld [vmem:[#allocation2 + $0x68] sm:$0xff]
    %v337 = vld [vmem:[#allocation2 + $0x70] sm:$0xff]
    %v338 = vld [vmem:[#allocation2 + $0x78] sm:$0xff]
    %v339 = vpack.c.bf16 %v324, %v323
    %v340 = vpack.c.bf16 %v326, %v325
    %v341 = vpack.c.bf16 %v328, %v327
    %v342 = vpack.c.bf16 %v330, %v329
    %v343 = vpack.c.bf16 %v332, %v331
    %v344 = vpack.c.bf16 %v334, %v333
    %v345 = vpack.c.bf16 %v336, %v335
    %v346 = vpack.c.bf16 %v338, %v337
    %v363 = vunpack.c.l.b16 %v307
    %v364 = vunpack.c.l.b16 %v308
    %v365 = vunpack.c.l.b16 %v309
    %v366 = vunpack.c.l.b16 %v310
    %v367 = vunpack.c.l.b16 %v311
    %v368 = vunpack.c.l.b16 %v312
    %v369 = vunpack.c.l.b16 %v313
    %v370 = vunpack.c.l.b16 %v314
    %v371 = vunpack.c.l.b16 %v315
    %v372 = vunpack.c.l.b16 %v316
    %v373 = vunpack.c.l.b16 %v317
    %v374 = vunpack.c.l.b16 %v318
    %v375 = vunpack.c.l.b16 %v319
    %v376 = vunpack.c.l.b16 %v320
    %v377 = vunpack.c.l.b16 %v321
    %v378 = vunpack.c.l.b16 %v322
    %v379 = vpack.c.b16 %v364, %v363
    %v380 = vpack.c.b16 %v366, %v365
    %v381 = vpack.c.b16 %v368, %v367
    %v382 = vpack.c.b16 %v370, %v369
    %v383 = vpack.c.b16 %v372, %v371
    %v384 = vpack.c.b16 %v374, %v373
    %v385 = vpack.c.b16 %v376, %v375
    %v386 = vpack.c.b16 %v378, %v377
    %395 = vmatprep.subr.bf16.mxu0 0
    %396 = vmatpush1.bf16.msra.mxu0 %v339
    %397 = vmatprep.subr.bf16.mxu0 0
    %398 = vmatpush1.bf16.msra.mxu0 %v340
    %399 = vmatprep.subr.bf16.mxu0 0
    %400 = vmatpush1.bf16.msra.mxu0 %v341
    %401 = vmatprep.subr.bf16.mxu0 0
    %402 = vmatpush1.bf16.msra.mxu0 %v342
    %403 = vmatprep.subr.bf16.mxu0 0
    %404 = vmatpush1.bf16.msra.mxu0 %v343
    %405 = vmatprep.subr.bf16.mxu0 0
    %406 = vmatpush1.bf16.msra.mxu0 %v344
    %407 = vmatprep.subr.bf16.mxu0 0
    %408 = vmatpush1.bf16.msra.mxu0 %v345
    %409 = vmatprep.subr.bf16.mxu0 0
    %410 = vmatpush1.bf16.msra.mxu0 %v346
    %411 = vmatprep.subr.bf16.mxu0 0
    %412 = vmatpush1.bf16.msra.mxu0 0
    %413 = vmatprep.subr.bf16.mxu0 0
    %414 = vmatpush1.bf16.msra.mxu0 0
    %415 = vmatprep.subr.bf16.mxu0 0
    %416 = vmatpush1.bf16.msra.mxu0 0
    %417 = vmatprep.subr.bf16.mxu0 0
    %418 = vmatpush1.bf16.msra.mxu0 0
    %419 = vmatprep.subr.bf16.mxu0 0
    %420 = vmatpush1.bf16.msra.mxu0 0
    %421 = vmatprep.subr.bf16.mxu0 0
    %422 = vmatpush1.bf16.msra.mxu0 0
    %423 = vmatprep.subr.bf16.mxu0 0
    %424 = vmatpush1.bf16.msra.mxu0 0
    %425 = vmatprep.subr.bf16.mxu0 0
    %426 = vmatpush1.bf16.msra.mxu0 0
    %427 = vmatprep.mubr.bf16.mxu0 0
    %428 = vmatmul.mubr.bf16.gmra.mrb[0].mxu0 %v379
    %v429 = vpop.f32.mrb[0].mxu0
    %v430 = vadd.f32 0.0, %v429
    %v431 = vpop.f32.mrb[0].mxu0
    %v432 = vpop.f32.mrb[0].mxu0
    %v433 = vadd.f32 0.0, %v432
    %v434 = vpop.f32.mrb[0].mxu0
    %435 = vmatprep.mubr.bf16.mxu0 0
    %436 = vmatmul.mubr.bf16.gmra.mrb[0].mxu0 %v380
    %v437 = vpop.f32.mrb[0].mxu0
    %v438 = vadd.f32 0.0, %v437
    %v439 = vpop.f32.mrb[0].mxu0
    %v440 = vpop.f32.mrb[0].mxu0
    %v441 = vadd.f32 0.0, %v440
    %v442 = vpop.f32.mrb[0].mxu0
    %443 = vmatprep.mubr.bf16.mxu0 0
    %444 = vmatmul.mubr.bf16.gmra.mrb[0].mxu0 %v381
    %v445 = vpop.f32.mrb[0].mxu0
    %v446 = vadd.f32 0.0, %v445
    %v447 = vpop.f32.mrb[0].mxu0
    %v448 = vpop.f32.mrb[0].mxu0
    %v449 = vadd.f32 0.0, %v448
    %v450 = vpop.f32.mrb[0].mxu0
    %451 = vmatprep.mubr.bf16.mxu0 0
    %452 = vmatmul.mubr.bf16.gmra.mrb[0].mxu0 %v382
    %v453 = vpop.f32.mrb[0].mxu0
    %v454 = vadd.f32 0.0, %v453
    %v455 = vpop.f32.mrb[0].mxu0
    %v456 = vpop.f32.mrb[0].mxu0
    %v457 = vadd.f32 0.0, %v456
    %v458 = vpop.f32.mrb[0].mxu0
    %459 = vmatprep.mubr.bf16.mxu0 0
    %460 = vmatmul.mubr.bf16.gmra.mrb[0].mxu0 %v383
    %v461 = vpop.f32.mrb[0].mxu0
    %v462 = vadd.f32 0.0, %v461
    %v463 = vpop.f32.mrb[0].mxu0
    %v464 = vpop.f32.mrb[0].mxu0
    %v465 = vadd.f32 0.0, %v464
    %v466 = vpop.f32.mrb[0].mxu0
    %467 = vmatprep.mubr.bf16.mxu0 0
    %468 = vmatmul.mubr.bf16.gmra.mrb[0].mxu0 %v384
    %v469 = vpop.f32.mrb[0].mxu0
    %v470 = vadd.f32 0.0, %v469
    %v471 = vpop.f32.mrb[0].mxu0
    %v472 = vpop.f32.mrb[0].mxu0
    %v473 = vadd.f32 0.0, %v472
    %v474 = vpop.f32.mrb[0].mxu0
    %475 = vmatprep.mubr.bf16.mxu0 0
    %476 = vmatmul.mubr.bf16.gmra.mrb[0].mxu0 %v385
    %v477 = vpop.f32.mrb[0].mxu0
    %v478 = vadd.f32 0.0, %v477
    %v479 = vpop.f32.mrb[0].mxu0
    %v480 = vpop.f32.mrb[0].mxu0
    %v481 = vadd.f32 0.0, %v480
    %v482 = vpop.f32.mrb[0].mxu0
    %483 = vmatprep.mubr.bf16.mxu0 0
    %484 = vmatmul.mubr.bf16.gmra.mrb[0].mxu0 %v386
    %v485 = vpop.f32.mrb[0].mxu0
    %v486 = vadd.f32 0.0, %v485
    %v487 = vpop.f32.mrb[0].mxu0
    %v488 = vpop.f32.mrb[0].mxu0
    %v489 = vadd.f32 0.0, %v488
    %v490 = vpop.f32.mrb[0].mxu0
    %491 = vdwg.mxu0
    %492 = vst [vmem:[#allocation3] sm:$0xff] %v430
    %493 = vst [vmem:[#allocation3 + $0x8] sm:$0xff] %v433
    %494 = vst [vmem:[#allocation3 + $0x10] sm:$0xff] %v438
    %495 = vst [vmem:[#allocation3 + $0x18] sm:$0xff] %v441
    %496 = vst [vmem:[#allocation3 + $0x20] sm:$0xff] %v446
    %497 = vst [vmem:[#allocation3 + $0x28] sm:$0xff] %v449
    %498 = vst [vmem:[#allocation3 + $0x30] sm:$0xff] %v454
    %499 = vst [vmem:[#allocation3 + $0x38] sm:$0xff] %v457
    %500 = vst [vmem:[#allocation3 + $0x40] sm:$0xff] %v462
    %501 = vst [vmem:[#allocation3 + $0x48] sm:$0xff] %v465
    %502 = vst [vmem:[#allocation3 + $0x50] sm:$0xff] %v470
    %503 = vst [vmem:[#allocation3 + $0x58] sm:$0xff] %v473
    %504 = vst [vmem:[#allocation3 + $0x60] sm:$0xff] %v478
    %505 = vst [vmem:[#allocation3 + $0x68] sm:$0xff] %v481
    %506 = vst [vmem:[#allocation3 + $0x70] sm:$0xff] %v486
    %507 = vst [vmem:[#allocation3 + $0x78] sm:$0xff] %v489
    %v508 = vld [vmem:[#allocation7] sm:$0xf]
    %v509 = vld [vmem:[#allocation7 + $0x4] sm:$0xf]
    %v510 = vld [vmem:[#allocation7 + $0x8] sm:$0xf]
    %v511 = vld [vmem:[#allocation7 + $0xc] sm:$0xf]
    %v512 = vld [vmem:[#allocation7 + $0x10] sm:$0xf]
    %v513 = vld [vmem:[#allocation7 + $0x14] sm:$0xf]
    %v514 = vld [vmem:[#allocation7 + $0x18] sm:$0xf]
    %v515 = vld [vmem:[#allocation7 + $0x1c] sm:$0xf]
    %v516 = vld [vmem:[#allocation7 + $0x20] sm:$0xf]
    %v517 = vld [vmem:[#allocation7 + $0x24] sm:$0xf]
    %v518 = vld [vmem:[#allocation7 + $0x28] sm:$0xf]
    %v519 = vld [vmem:[#allocation7 + $0x2c] sm:$0xf]
    %v520 = vld [vmem:[#allocation7 + $0x30] sm:$0xf]
    %v521 = vld [vmem:[#allocation7 + $0x34] sm:$0xf]
    %v522 = vld [vmem:[#allocation7 + $0x38] sm:$0xf]
    %v523 = vld [vmem:[#allocation7 + $0x3c] sm:$0xf]
    %v524 = vld [vmem:[#allocation3] sm:$0xff]
    %v525 = vld [vmem:[#allocation3 + $0x8] sm:$0xff]
    %v526 = vld [vmem:[#allocation3 + $0x10] sm:$0xff]
    %v527 = vld [vmem:[#allocation3 + $0x18] sm:$0xff]
    %v528 = vld [vmem:[#allocation3 + $0x20] sm:$0xff]
    %v529 = vld [vmem:[#allocation3 + $0x28] sm:$0xff]
    %v530 = vld [vmem:[#allocation3 + $0x30] sm:$0xff]
    %v531 = vld [vmem:[#allocation3 + $0x38] sm:$0xff]
    %v532 = vld [vmem:[#allocation3 + $0x40] sm:$0xff]
    %v533 = vld [vmem:[#allocation3 + $0x48] sm:$0xff]
    %v534 = vld [vmem:[#allocation3 + $0x50] sm:$0xff]
    %v535 = vld [vmem:[#allocation3 + $0x58] sm:$0xff]
    %v536 = vld [vmem:[#allocation3 + $0x60] sm:$0xff]
    %v537 = vld [vmem:[#allocation3 + $0x68] sm:$0xff]
    %v538 = vld [vmem:[#allocation3 + $0x70] sm:$0xff]
    %v539 = vld [vmem:[#allocation3 + $0x78] sm:$0xff]
    %v540 = vpack.c.bf16 %v525, %v524
    %v541 = vpack.c.bf16 %v527, %v526
    %v542 = vpack.c.bf16 %v529, %v528
    %v543 = vpack.c.bf16 %v531, %v530
    %v544 = vpack.c.bf16 %v533, %v532
    %v545 = vpack.c.bf16 %v535, %v534
    %v546 = vpack.c.bf16 %v537, %v536
    %v547 = vpack.c.bf16 %v539, %v538
    %v564 = vunpack.c.l.b16 %v508
    %v565 = vunpack.c.l.b16 %v509
    %v566 = vunpack.c.l.b16 %v510
    %v567 = vunpack.c.l.b16 %v511
    %v568 = vunpack.c.l.b16 %v512
    %v569 = vunpack.c.l.b16 %v513
    %v570 = vunpack.c.l.b16 %v514
    %v571 = vunpack.c.l.b16 %v515
    %v572 = vunpack.c.l.b16 %v516
    %v573 = vunpack.c.l.b16 %v517
    %v574 = vunpack.c.l.b16 %v518
    %v575 = vunpack.c.l.b16 %v519
    %v576 = vunpack.c.l.b16 %v520
    %v577 = vunpack.c.l.b16 %v521
    %v578 = vunpack.c.l.b16 %v522
    %v579 = vunpack.c.l.b16 %v523
    %v580 = vpack.c.b16 %v565, %v564
    %v581 = vpack.c.b16 %v567, %v566
    %v582 = vpack.c.b16 %v569, %v568
    %v583 = vpack.c.b16 %v571, %v570
    %v584 = vpack.c.b16 %v573, %v572
    %v585 = vpack.c.b16 %v575, %v574
    %v586 = vpack.c.b16 %v577, %v576
    %v587 = vpack.c.b16 %v579, %v578
    %596 = vmatprep.subr.bf16.mxu0 0
    %597 = vmatpush1.bf16.msra.mxu0 %v540
    %598 = vmatprep.subr.bf16.mxu0 0
    %599 = vmatpush1.bf16.msra.mxu0 %v541
    %600 = vmatprep.subr.bf16.mxu0 0
    %601 = vmatpush1.bf16.msra.mxu0 %v542
    %602 = vmatprep.subr.bf16.mxu0 0
    %603 = vmatpush1.bf16.msra.mxu0 %v543
    %604 = vmatprep.subr.bf16.mxu0 0
    %605 = vmatpush1.bf16.msra.mxu0 %v544
    %606 = vmatprep.subr.bf16.mxu0 0
    %607 = vmatpush1.bf16.msra.mxu0 %v545
    %608 = vmatprep.subr.bf16.mxu0 0
    %609 = vmatpush1.bf16.msra.mxu0 %v546
    %610 = vmatprep.subr.bf16.mxu0 0
    %611 = vmatpush1.bf16.msra.mxu0 %v547
    %612 = vmatprep.subr.bf16.mxu0 0
    %613 = vmatpush1.bf16.msra.mxu0 0
    %614 = vmatprep.subr.bf16.mxu0 0
    %615 = vmatpush1.bf16.msra.mxu0 0
    %616 = vmatprep.subr.bf16.mxu0 0
    %617 = vmatpush1.bf16.msra.mxu0 0
    %618 = vmatprep.subr.bf16.mxu0 0
    %619 = vmatpush1.bf16.msra.mxu0 0
    %620 = vmatprep.subr.bf16.mxu0 0
    %621 = vmatpush1.bf16.msra.mxu0 0
    %622 = vmatprep.subr.bf16.mxu0 0
    %623 = vmatpush1.bf16.msra.mxu0 0
    %624 = vmatprep.subr.bf16.mxu0 0
    %625 = vmatpush1.bf16.msra.mxu0 0
    %626 = vmatprep.subr.bf16.mxu0 0
    %627 = vmatpush1.bf16.msra.mxu0 0
    %628 = vmatprep.mubr.bf16.mxu0 0
    %629 = vmatmul.mubr.bf16.gmra.mrb[0].mxu0 %v580
    %v630 = vpop.f32.mrb[0].mxu0
    %v631 = vadd.f32 0.0, %v630
    %v632 = vpop.f32.mrb[0].mxu0
    %v633 = vpop.f32.mrb[0].mxu0
    %v634 = vadd.f32 0.0, %v633
    %v635 = vpop.f32.mrb[0].mxu0
    %636 = vmatprep.mubr.bf16.mxu0 0
    %637 = vmatmul.mubr.bf16.gmra.mrb[0].mxu0 %v581
    %v638 = vpop.f32.mrb[0].mxu0
    %v639 = vadd.f32 0.0, %v638
    %v640 = vpop.f32.mrb[0].mxu0
    %v641 = vpop.f32.mrb[0].mxu0
    %v642 = vadd.f32 0.0, %v641
    %v643 = vpop.f32.mrb[0].mxu0
    %644 = vmatprep.mubr.bf16.mxu0 0
    %645 = vmatmul.mubr.bf16.gmra.mrb[0].mxu0 %v582
    %v646 = vpop.f32.mrb[0].mxu0
    %v647 = vadd.f32 0.0, %v646
    %v648 = vpop.f32.mrb[0].mxu0
    %v649 = vpop.f32.mrb[0].mxu0
    %v650 = vadd.f32 0.0, %v649
    %v651 = vpop.f32.mrb[0].mxu0
    %652 = vmatprep.mubr.bf16.mxu0 0
    %653 = vmatmul.mubr.bf16.gmra.mrb[0].mxu0 %v583
    %v654 = vpop.f32.mrb[0].mxu0
    %v655 = vadd.f32 0.0, %v654
    %v656 = vpop.f32.mrb[0].mxu0
    %v657 = vpop.f32.mrb[0].mxu0
    %v658 = vadd.f32 0.0, %v657
    %v659 = vpop.f32.mrb[0].mxu0
    %660 = vmatprep.mubr.bf16.mxu0 0
    %661 = vmatmul.mubr.bf16.gmra.mrb[0].mxu0 %v584
    %v662 = vpop.f32.mrb[0].mxu0
    %v663 = vadd.f32 0.0, %v662
    %v664 = vpop.f32.mrb[0].mxu0
    %v665 = vpop.f32.mrb[0].mxu0
    %v666 = vadd.f32 0.0, %v665
    %v667 = vpop.f32.mrb[0].mxu0
    %668 = vmatprep.mubr.bf16.mxu0 0
    %669 = vmatmul.mubr.bf16.gmra.mrb[0].mxu0 %v585
    %v670 = vpop.f32.mrb[0].mxu0
    %v671 = vadd.f32 0.0, %v670
    %v672 = vpop.f32.mrb[0].mxu0
    %v673 = vpop.f32.mrb[0].mxu0
    %v674 = vadd.f32 0.0, %v673
    %v675 = vpop.f32.mrb[0].mxu0
    %676 = vmatprep.mubr.bf16.mxu0 0
    %677 = vmatmul.mubr.bf16.gmra.mrb[0].mxu0 %v586
    %v678 = vpop.f32.mrb[0].mxu0
    %v679 = vadd.f32 0.0, %v678
    %v680 = vpop.f32.mrb[0].mxu0
    %v681 = vpop.f32.mrb[0].mxu0
    %v682 = vadd.f32 0.0, %v681
    %v683 = vpop.f32.mrb[0].mxu0
    %684 = vmatprep.mubr.bf16.mxu0 0
    %685 = vmatmul.mubr.bf16.gmra.mrb[0].mxu0 %v587
    %v686 = vpop.f32.mrb[0].mxu0
    %v687 = vadd.f32 0.0, %v686
    %v688 = vpop.f32.mrb[0].mxu0
    %v689 = vpop.f32.mrb[0].mxu0
    %v690 = vadd.f32 0.0, %v689
    %v691 = vpop.f32.mrb[0].mxu0
    %692 = vdwg.mxu0
    %693 = vst [vmem:[#allocation2] sm:$0xff] %v631
    %694 = vst [vmem:[#allocation2 + $0x8] sm:$0xff] %v634
    %695 = vst [vmem:[#allocation2 + $0x10] sm:$0xff] %v639
    %696 = vst [vmem:[#allocation2 + $0x18] sm:$0xff] %v642
    %697 = vst [vmem:[#allocation2 + $0x20] sm:$0xff] %v647
    %698 = vst [vmem:[#allocation2 + $0x28] sm:$0xff] %v650
    %699 = vst [vmem:[#allocation2 + $0x30] sm:$0xff] %v655
    %700 = vst [vmem:[#allocation2 + $0x38] sm:$0xff] %v658
    %701 = vst [vmem:[#allocation2 + $0x40] sm:$0xff] %v663
    %702 = vst [vmem:[#allocation2 + $0x48] sm:$0xff] %v666
    %703 = vst [vmem:[#allocation2 + $0x50] sm:$0xff] %v671
    %704 = vst [vmem:[#allocation2 + $0x58] sm:$0xff] %v674
    %705 = vst [vmem:[#allocation2 + $0x60] sm:$0xff] %v679
    %706 = vst [vmem:[#allocation2 + $0x68] sm:$0xff] %v682
    %707 = vst [vmem:[#allocation2 + $0x70] sm:$0xff] %v687
    %708 = vst [vmem:[#allocation2 + $0x78] sm:$0xff] %v690
    %v709 = vld [vmem:[#allocation7] sm:$0xf]
    %v710 = vld [vmem:[#allocation7 + $0x4] sm:$0xf]
    %v711 = vld [vmem:[#allocation7 + $0x8] sm:$0xf]
    %v712 = vld [vmem:[#allocation7 + $0xc] sm:$0xf]
    %v713 = vld [vmem:[#allocation7 + $0x10] sm:$0xf]
    %v714 = vld [vmem:[#allocation7 + $0x14] sm:$0xf]
    %v715 = vld [vmem:[#allocation7 + $0x18] sm:$0xf]
    %v716 = vld [vmem:[#allocation7 + $0x1c] sm:$0xf]
    %v717 = vld [vmem:[#allocation7 + $0x20] sm:$0xf]
    %v718 = vld [vmem:[#allocation7 + $0x24] sm:$0xf]
    %v719 = vld [vmem:[#allocation7 + $0x28] sm:$0xf]
    %v720 = vld [vmem:[#allocation7 + $0x2c] sm:$0xf]
    %v721 = vld [vmem:[#allocation7 + $0x30] sm:$0xf]
    %v722 = vld [vmem:[#allocation7 + $0x34] sm:$0xf]
    %v723 = vld [vmem:[#allocation7 + $0x38] sm:$0xf]
    %v724 = vld [vmem:[#allocation7 + $0x3c] sm:$0xf]
    %v725 = vld [vmem:[#allocation2] sm:$0xff]
    %v726 = vld [vmem:[#allocation2 + $0x8] sm:$0xff]
    %v727 = vld [vmem:[#allocation2 + $0x10] sm:$0xff]
    %v728 = vld [vmem:[#allocation2 + $0x18] sm:$0xff]
    %v729 = vld [vmem:[#allocation2 + $0x20] sm:$0xff]
    %v730 = vld [vmem:[#allocation2 + $0x28] sm:$0xff]
    %v731 = vld [vmem:[#allocation2 + $0x30] sm:$0xff]
    %v732 = vld [vmem:[#allocation2 + $0x38] sm:$0xff]
    %v733 = vld [vmem:[#allocation2 + $0x40] sm:$0xff]
    %v734 = vld [vmem:[#allocation2 + $0x48] sm:$0xff]
    %v735 = vld [vmem:[#allocation2 + $0x50] sm:$0xff]
    %v736 = vld [vmem:[#allocation2 + $0x58] sm:$0xff]
    %v737 = vld [vmem:[#allocation2 + $0x60] sm:$0xff]
    %v738 = vld [vmem:[#allocation2 + $0x68] sm:$0xff]
    %v739 = vld [vmem:[#allocation2 + $0x70] sm:$0xff]
    %v740 = vld [vmem:[#allocation2 + $0x78] sm:$0xff]
    %v741 = vpack.c.bf16 %v726, %v725
    %v742 = vpack.c.bf16 %v728, %v727
    %v743 = vpack.c.bf16 %v730, %v729
    %v744 = vpack.c.bf16 %v732, %v731
    %v745 = vpack.c.bf16 %v734, %v733
    %v746 = vpack.c.bf16 %v736, %v735
    %v747 = vpack.c.bf16 %v738, %v737
    %v748 = vpack.c.bf16 %v740, %v739
    %v765 = vunpack.c.l.b16 %v709
    %v766 = vunpack.c.l.b16 %v710
    %v767 = vunpack.c.l.b16 %v711
    %v768 = vunpack.c.l.b16 %v712
    %v769 = vunpack.c.l.b16 %v713
    %v770 = vunpack.c.l.b16 %v714
    %v771 = vunpack.c.l.b16 %v715
    %v772 = vunpack.c.l.b16 %v716
    %v773 = vunpack.c.l.b16 %v717
    %v774 = vunpack.c.l.b16 %v718
    %v775 = vunpack.c.l.b16 %v719
    %v776 = vunpack.c.l.b16 %v720
    %v777 = vunpack.c.l.b16 %v721
    %v778 = vunpack.c.l.b16 %v722
    %v779 = vunpack.c.l.b16 %v723
    %v780 = vunpack.c.l.b16 %v724
    %v781 = vpack.c.b16 %v766, %v765
    %v782 = vpack.c.b16 %v768, %v767
    %v783 = vpack.c.b16 %v770, %v769
    %v784 = vpack.c.b16 %v772, %v771
    %v785 = vpack.c.b16 %v774, %v773
    %v786 = vpack.c.b16 %v776, %v775
    %v787 = vpack.c.b16 %v778, %v777
    %v788 = vpack.c.b16 %v780, %v779
    %797 = vmatprep.subr.bf16.mxu0 0
    %798 = vmatpush1.bf16.msra.mxu0 %v741
    %799 = vmatprep.subr.bf16.mxu0 0
    %800 = vmatpush1.bf16.msra.mxu0 %v742
    %801 = vmatprep.subr.bf16.mxu0 0
    %802 = vmatpush1.bf16.msra.mxu0 %v743
    %803 = vmatprep.subr.bf16.mxu0 0
    %804 = vmatpush1.bf16.msra.mxu0 %v744
    %805 = vmatprep.subr.bf16.mxu0 0
    %806 = vmatpush1.bf16.msra.mxu0 %v745
    %807 = vmatprep.subr.bf16.mxu0 0
    %808 = vmatpush1.bf16.msra.mxu0 %v746
    %809 = vmatprep.subr.bf16.mxu0 0
    %810 = vmatpush1.bf16.msra.mxu0 %v747
    %811 = vmatprep.subr.bf16.mxu0 0
    %812 = vmatpush1.bf16.msra.mxu0 %v748
    %813 = vmatprep.subr.bf16.mxu0 0
    %814 = vmatpush1.bf16.msra.mxu0 0
    %815 = vmatprep.subr.bf16.mxu0 0
    %816 = vmatpush1.bf16.msra.mxu0 0
    %817 = vmatprep.subr.bf16.mxu0 0
    %818 = vmatpush1.bf16.msra.mxu0 0
    %819 = vmatprep.subr.bf16.mxu0 0
    %820 = vmatpush1.bf16.msra.mxu0 0
    %821 = vmatprep.subr.bf16.mxu0 0
    %822 = vmatpush1.bf16.msra.mxu0 0
    %823 = vmatprep.subr.bf16.mxu0 0
    %824 = vmatpush1.bf16.msra.mxu0 0
    %825 = vmatprep.subr.bf16.mxu0 0
    %826 = vmatpush1.bf16.msra.mxu0 0
    %827 = vmatprep.subr.bf16.mxu0 0
    %828 = vmatpush1.bf16.msra.mxu0 0
    %829 = vmatprep.mubr.bf16.mxu0 0
    %830 = vmatmul.mubr.bf16.gmra.mrb[0].mxu0 %v781
    %v831 = vpop.f32.mrb[0].mxu0
    %v832 = vadd.f32 0.0, %v831
    %v833 = vpop.f32.mrb[0].mxu0
    %v834 = vpop.f32.mrb[0].mxu0
    %v835 = vadd.f32 0.0, %v834
    %v836 = vpop.f32.mrb[0].mxu0
    %837 = vmatprep.mubr.bf16.mxu0 0
    %838 = vmatmul.mubr.bf16.gmra.mrb[0].mxu0 %v782
    %v839 = vpop.f32.mrb[0].mxu0
    %v840 = vadd.f32 0.0, %v839
    %v841 = vpop.f32.mrb[0].mxu0
    %v842 = vpop.f32.mrb[0].mxu0
    %v843 = vadd.f32 0.0, %v842
    %v844 = vpop.f32.mrb[0].mxu0
    %845 = vmatprep.mubr.bf16.mxu0 0
    %846 = vmatmul.mubr.bf16.gmra.mrb[0].mxu0 %v783
    %v847 = vpop.f32.mrb[0].mxu0
    %v848 = vadd.f32 0.0, %v847
    %v849 = vpop.f32.mrb[0].mxu0
    %v850 = vpop.f32.mrb[0].mxu0
    %v851 = vadd.f32 0.0, %v850
    %v852 = vpop.f32.mrb[0].mxu0
    %853 = vmatprep.mubr.bf16.mxu0 0
    %854 = vmatmul.mubr.bf16.gmra.mrb[0].mxu0 %v784
    %v855 = vpop.f32.mrb[0].mxu0
    %v856 = vadd.f32 0.0, %v855
    %v857 = vpop.f32.mrb[0].mxu0
    %v858 = vpop.f32.mrb[0].mxu0
    %v859 = vadd.f32 0.0, %v858
    %v860 = vpop.f32.mrb[0].mxu0
    %861 = vmatprep.mubr.bf16.mxu0 0
    %862 = vmatmul.mubr.bf16.gmra.mrb[0].mxu0 %v785
    %v863 = vpop.f32.mrb[0].mxu0
    %v864 = vadd.f32 0.0, %v863
    %v865 = vpop.f32.mrb[0].mxu0
    %v866 = vpop.f32.mrb[0].mxu0
    %v867 = vadd.f32 0.0, %v866
    %v868 = vpop.f32.mrb[0].mxu0
    %869 = vmatprep.mubr.bf16.mxu0 0
    %870 = vmatmul.mubr.bf16.gmra.mrb[0].mxu0 %v786
    %v871 = vpop.f32.mrb[0].mxu0
    %v872 = vadd.f32 0.0, %v871
    %v873 = vpop.f32.mrb[0].mxu0
    %v874 = vpop.f32.mrb[0].mxu0
    %v875 = vadd.f32 0.0, %v874
    %v876 = vpop.f32.mrb[0].mxu0
    %877 = vmatprep.mubr.bf16.mxu0 0
    %878 = vmatmul.mubr.bf16.gmra.mrb[0].mxu0 %v787
    %v879 = vpop.f32.mrb[0].mxu0
    %v880 = vadd.f32 0.0, %v879
    %v881 = vpop.f32.mrb[0].mxu0
    %v882 = vpop.f32.mrb[0].mxu0
    %v883 = vadd.f32 0.0, %v882
    %v884 = vpop.f32.mrb[0].mxu0
    %885 = vmatprep.mubr.bf16.mxu0 0
    %886 = vmatmul.mubr.bf16.gmra.mrb[0].mxu0 %v788
    %v887 = vpop.f32.mrb[0].mxu0
    %v888 = vadd.f32 0.0, %v887
    %v889 = vpop.f32.mrb[0].mxu0
    %v890 = vpop.f32.mrb[0].mxu0
    %v891 = vadd.f32 0.0, %v890
    %v892 = vpop.f32.mrb[0].mxu0
    %893 = vdwg.mxu0
    %894 = vst [vmem:[#allocation3] sm:$0xff] %v832
    %895 = vst [vmem:[#allocation3 + $0x8] sm:$0xff] %v835
    %896 = vst [vmem:[#allocation3 + $0x10] sm:$0xff] %v840
    %897 = vst [vmem:[#allocation3 + $0x18] sm:$0xff] %v843
    %898 = vst [vmem:[#allocation3 + $0x20] sm:$0xff] %v848
    %899 = vst [vmem:[#allocation3 + $0x28] sm:$0xff] %v851
    %900 = vst [vmem:[#allocation3 + $0x30] sm:$0xff] %v856
    %901 = vst [vmem:[#allocation3 + $0x38] sm:$0xff] %v859
    %902 = vst [vmem:[#allocation3 + $0x40] sm:$0xff] %v864
    %903 = vst [vmem:[#allocation3 + $0x48] sm:$0xff] %v867
    %904 = vst [vmem:[#allocation3 + $0x50] sm:$0xff] %v872
    %905 = vst [vmem:[#allocation3 + $0x58] sm:$0xff] %v875
    %906 = vst [vmem:[#allocation3 + $0x60] sm:$0xff] %v880
    %907 = vst [vmem:[#allocation3 + $0x68] sm:$0xff] %v883
    %908 = vst [vmem:[#allocation3 + $0x70] sm:$0xff] %v888
    %909 = vst [vmem:[#allocation3 + $0x78] sm:$0xff] %v891
    %v910 = vld [vmem:[#allocation3] sm:$0xff]
    %v911 = vld [vmem:[#allocation3 + $0x8] sm:$0xff]
    %v912 = vld [vmem:[#allocation3 + $0x10] sm:$0xff]
    %v913 = vld [vmem:[#allocation3 + $0x18] sm:$0xff]
    %v914 = vld [vmem:[#allocation3 + $0x20] sm:$0xff]
    %v915 = vld [vmem:[#allocation3 + $0x28] sm:$0xff]
    %v916 = vld [vmem:[#allocation3 + $0x30] sm:$0xff]
    %v917 = vld [vmem:[#allocation3 + $0x38] sm:$0xff]
    %v918 = vld [vmem:[#allocation3 + $0x40] sm:$0xff]
    %v919 = vld [vmem:[#allocation3 + $0x48] sm:$0xff]
    %v920 = vld [vmem:[#allocation3 + $0x50] sm:$0xff]
    %v921 = vld [vmem:[#allocation3 + $0x58] sm:$0xff]
    %v922 = vld [vmem:[#allocation3 + $0x60] sm:$0xff]
    %v923 = vld [vmem:[#allocation3 + $0x68] sm:$0xff]
    %v924 = vld [vmem:[#allocation3 + $0x70] sm:$0xff]
    %v925 = vld [vmem:[#allocation3 + $0x78] sm:$0xff]
    %v926 = vld [vmem:[%s3] sm:$0x1]
    %v928 = vlaneseq
    %v929 = vshrl.u32 %v928, 7
    %v930 = vsub.s32 0, %v929
    %v931 = vrot.slane %v926, %v930
    %v933 = vadd.f32 %v910, %v931
    %v934 = vadd.f32 %v911, %v931
    %v935 = vadd.f32 %v912, %v931
    %v936 = vadd.f32 %v913, %v931
    %v937 = vadd.f32 %v914, %v931
    %v938 = vadd.f32 %v915, %v931
    %v939 = vadd.f32 %v916, %v931
    %v940 = vadd.f32 %v917, %v931
    %v941 = vadd.f32 %v918, %v931
    %v942 = vadd.f32 %v919, %v931
    %v943 = vadd.f32 %v920, %v931
    %v944 = vadd.f32 %v921, %v931
    %v945 = vadd.f32 %v922, %v931
    %v946 = vadd.f32 %v923, %v931
    %v947 = vadd.f32 %v924, %v931
    %v948 = vadd.f32 %v925, %v931
    %v949 = vmax.f32 %v933, 0.0
    %v950 = vmax.f32 %v934, 0.0
    %v951 = vmax.f32 %v935, 0.0
    %v952 = vmax.f32 %v936, 0.0
    %v953 = vmax.f32 %v937, 0.0
    %v954 = vmax.f32 %v938, 0.0
    %v955 = vmax.f32 %v939, 0.0
    %v956 = vmax.f32 %v940, 0.0
    %v957 = vmax.f32 %v941, 0.0
    %v958 = vmax.f32 %v942, 0.0
    %v959 = vmax.f32 %v943, 0.0
    %v960 = vmax.f32 %v944, 0.0
    %v961 = vmax.f32 %v945, 0.0
    %v962 = vmax.f32 %v946, 0.0
    %v963 = vmax.f32 %v947, 0.0
    %v964 = vmax.f32 %v948, 0.0
    %v965 = vpack.c.bf16 %v950, %v949
    %v966 = vpack.c.bf16 %v952, %v951
    %v967 = vpack.c.bf16 %v954, %v953
    %v968 = vpack.c.bf16 %v956, %v955
    %v969 = vpack.c.bf16 %v958, %v957
    %v970 = vpack.c.bf16 %v960, %v959
    %v971 = vpack.c.bf16 %v962, %v961
    %v972 = vpack.c.bf16 %v964, %v963
    %v981 = vunpack.c.l.b16 %v965
    %v982 = vunpack.c.h.b16 %v965
    %v983 = vunpack.c.l.b16 %v966
    %v984 = vunpack.c.h.b16 %v966
    %v985 = vunpack.c.l.b16 %v967
    %v986 = vunpack.c.h.b16 %v967
    %v987 = vunpack.c.l.b16 %v968
    %v988 = vunpack.c.h.b16 %v968
    %v989 = vunpack.c.l.b16 %v969
    %v990 = vunpack.c.h.b16 %v969
    %v991 = vunpack.c.l.b16 %v970
    %v992 = vunpack.c.h.b16 %v970
    %v993 = vunpack.c.l.b16 %v971
    %v994 = vunpack.c.h.b16 %v971
    %v995 = vunpack.c.l.b16 %v972
    %v996 = vunpack.c.h.b16 %v972
    %v997 = vpack.c.b16 %v981, %v981
    %v998 = vpack.c.b16 %v982, %v982
    %v999 = vpack.c.b16 %v983, %v983
    %v1000 = vpack.c.b16 %v984, %v984
    %v1001 = vpack.c.b16 %v985, %v985
    %v1002 = vpack.c.b16 %v986, %v986
    %v1003 = vpack.c.b16 %v987, %v987
    %v1004 = vpack.c.b16 %v988, %v988
    %v1005 = vpack.c.b16 %v989, %v989
    %v1006 = vpack.c.b16 %v990, %v990
    %v1007 = vpack.c.b16 %v991, %v991
    %v1008 = vpack.c.b16 %v992, %v992
    %v1009 = vpack.c.b16 %v993, %v993
    %v1010 = vpack.c.b16 %v994, %v994
    %v1011 = vpack.c.b16 %v995, %v995
    %v1012 = vpack.c.b16 %v996, %v996
    %1029 = vst [vmem:[#allocation10] sm:$0xf] %v997
    %1030 = vst [vmem:[#allocation10 + $0x4] sm:$0xf] %v998
    %1031 = vst [vmem:[#allocation10 + $0x8] sm:$0xf] %v999
    %1032 = vst [vmem:[#allocation10 + $0xc] sm:$0xf] %v1000
    %1033 = vst [vmem:[#allocation10 + $0x10] sm:$0xf] %v1001
    %1034 = vst [vmem:[#allocation10 + $0x14] sm:$0xf] %v1002
    %1035 = vst [vmem:[#allocation10 + $0x18] sm:$0xf] %v1003
    %1036 = vst [vmem:[#allocation10 + $0x1c] sm:$0xf] %v1004
    %1037 = vst [vmem:[#allocation10 + $0x20] sm:$0xf] %v1005
    %1038 = vst [vmem:[#allocation10 + $0x24] sm:$0xf] %v1006
    %1039 = vst [vmem:[#allocation10 + $0x28] sm:$0xf] %v1007
    %1040 = vst [vmem:[#allocation10 + $0x2c] sm:$0xf] %v1008
    %1041 = vst [vmem:[#allocation10 + $0x30] sm:$0xf] %v1009
    %1042 = vst [vmem:[#allocation10 + $0x34] sm:$0xf] %v1010
    %1043 = vst [vmem:[#allocation10 + $0x38] sm:$0xf] %v1011
    %1044 = vst [vmem:[#allocation10 + $0x3c] sm:$0xf] %v1012
    %v1045 = vld [vmem:[%s4] sm:$0xff]
    %1046 = vmatprep.subr.mxu0 0.0
    %1047 = vmatpush1.msra.mxu0 %v949
    %1048 = vmatprep.subr.mxu0 0.0
    %1049 = vmatpush1.msra.mxu0 %v950
    %1050 = vmatprep.subr.mxu0 0.0
    %1051 = vmatpush1.msra.mxu0 %v951
    %1052 = vmatprep.subr.mxu0 0.0
    %1053 = vmatpush1.msra.mxu0 %v952
    %1054 = vmatprep.subr.mxu0 0.0
    %1055 = vmatpush1.msra.mxu0 %v953
    %1056 = vmatprep.subr.mxu0 0.0
    %1057 = vmatpush1.msra.mxu0 %v954
    %1058 = vmatprep.subr.mxu0 0.0
    %1059 = vmatpush1.msra.mxu0 %v955
    %1060 = vmatprep.subr.mxu0 0.0
    %1061 = vmatpush1.msra.mxu0 %v956
    %1062 = vmatprep.subr.mxu0 0.0
    %1063 = vmatpush1.msra.mxu0 %v957
    %1064 = vmatprep.subr.mxu0 0.0
    %1065 = vmatpush1.msra.mxu0 %v958
    %1066 = vmatprep.subr.mxu0 0.0
    %1067 = vmatpush1.msra.mxu0 %v959
    %1068 = vmatprep.subr.mxu0 0.0
    %1069 = vmatpush1.msra.mxu0 %v960
    %1070 = vmatprep.subr.mxu0 0.0
    %1071 = vmatpush1.msra.mxu0 %v961
    %1072 = vmatprep.subr.mxu0 0.0
    %1073 = vmatpush1.msra.mxu0 %v962
    %1074 = vmatprep.subr.mxu0 0.0
    %1075 = vmatpush1.msra.mxu0 %v963
    %1076 = vmatprep.subr.mxu0 0.0
    %1077 = vmatpush1.msra.mxu0 %v964
    %1078 = vmatprep.subr.mxu0 0.0
    %1079 = vmatpush1.msra.mxu0 0.0
    %1080 = vmatprep.subr.mxu0 0.0
    %1081 = vmatpush1.msra.mxu0 0.0
    %1082 = vmatprep.subr.mxu0 0.0
    %1083 = vmatpush1.msra.mxu0 0.0
    %1084 = vmatprep.subr.mxu0 0.0
    %1085 = vmatpush1.msra.mxu0 0.0
    %1086 = vmatprep.subr.mxu0 0.0
    %1087 = vmatpush1.msra.mxu0 0.0
    %1088 = vmatprep.subr.mxu0 0.0
    %1089 = vmatpush1.msra.mxu0 0.0
    %1090 = vmatprep.subr.mxu0 0.0
    %1091 = vmatpush1.msra.mxu0 0.0
    %1092 = vmatprep.subr.mxu0 0.0
    %1093 = vmatpush1.msra.mxu0 0.0
    %1094 = vmatprep.subr.mxu0 0.0
    %1095 = vmatpush1.msra.mxu0 0.0
    %1096 = vmatprep.subr.mxu0 0.0
    %1097 = vmatpush1.msra.mxu0 0.0
    %1098 = vmatprep.subr.mxu0 0.0
    %1099 = vmatpush1.msra.mxu0 0.0
    %1100 = vmatprep.subr.mxu0 0.0
    %1101 = vmatpush1.msra.mxu0 0.0
    %1102 = vmatprep.subr.mxu0 0.0
    %1103 = vmatpush1.msra.mxu0 0.0
    %1104 = vmatprep.subr.mxu0 0.0
    %1105 = vmatpush1.msra.mxu0 0.0
    %1106 = vmatprep.subr.mxu0 0.0
    %1107 = vmatpush1.msra.mxu0 0.0
    %1108 = vmatprep.subr.mxu0 0.0
    %1109 = vmatpush1.msra.mxu0 0.0
    %1110 = vmatprep.mubr.f32.mxu0 0.0
    %1111 = vmatmul.mubr.f32.gmra.mrb[0].mxu0 %v1045
    %v1112 = vpop.f32.mrb[0].mxu0
    %v1113 = vadd.f32 0.0, %v1112
    %v1114 = vpop.f32.mrb[0].mxu0
    %1115 = vdwg.mxu0
    %1116 = vst [vmem:[#allocation11] sm:$0xff] %v1113
    // Predicated region
    $region34: #{tpu_custom_call.1} parent=1 // pred_check
      _
    $region35: #{tpu_custom_call.1} parent=1 // pred_check_branch
      %1118 = sbr.rel (0) target = $region37
    $region36: #{tpu_custom_call.1} parent=1 // pred_region
      %s1120 = ssub.s32 1024, 1024
      %1121 = vsyncadd [#allocation6], %s1120
      %s1122 = sshll.u32 [#allocation10], 4
      %s1123 = int_to_ptr.vmem [resolvable:$true] %s1122
      %1128 = dma.vmem_to_hbm [thread:$0]  %s1123, 1024, %s5, [#allocation6], 64, 64, 4
    $region37: #{tpu_custom_call.1} parent=1 // pred_fallthru
      _
    // Predicated region
    $region38: #{tpu_custom_call.1} parent=1 // pred_check
      _
    $region39: #{tpu_custom_call.1} parent=1 // pred_check_branch
      %1130 = sbr.rel (0) target = $region41
    $region40: #{tpu_custom_call.1} parent=1 // pred_region
      %s1132 = ssub.s32 128, 128
      %1133 = vsyncadd [#allocation12], %s1132
      %s1135 = sshll.u32 [#allocation11], 4
      %s1136 = int_to_ptr.vmem [resolvable:$true] %s1135
      %1138 = dma.vmem_to_hbm [thread:$0]  %s1136, 128, %s6, [#allocation12]
    $region41: #{tpu_custom_call.1} parent=1 // pred_fallthru
      _
    // Predicated region
    $region42: #{tpu_custom_call.1} parent=1 // pred_check
      _
    $region43: #{tpu_custom_call.1} parent=1 // pred_check_branch
      %1140 = sbr.rel (0) target = $region45
    $region44: #{tpu_custom_call.1} parent=1 // pred_region
      %1141 = dma.done [#allocation6], 1024
    $region45: #{tpu_custom_call.1} parent=1 // pred_fallthru
      _
    // Predicated region
    $region46: #{tpu_custom_call.1} parent=1 // pred_check
      _
    $region47: #{tpu_custom_call.1} parent=1 // pred_check_branch
      %1143 = sbr.rel (0) target = $region49
    $region48: #{tpu_custom_call.1} parent=1 // pred_region
      %1144 = dma.done [#allocation12], 128
    $region49: #{tpu_custom_call.1} parent=1 // pred_fallthru
      _
    %1145 = vsyncpa [#allocation5], 1
    %1146 = vsyncpa [#allocation8], 1
    %1147 = vsyncpa [#allocation6], 1
    %1148 = vsyncpa [#allocation12], 1

</llo_original>
